<compile_context>
chip_gen: v7x
topology: tpu7x:2x2x1
jax: 0.10.0
libtpu: 0.0.40
codegen_flags: <defaults>
</compile_context>

<pallas_src>
import jax
import jax.numpy as jnp
from jax import lax
from jax.experimental import pallas as pl
from jax.experimental.pallas import tpu as pltpu


def clip_mlp_kernel(x_ref, w1_ref, b1_ref, w2_ref, b2_ref, o_ref):
    # x_ref : [TB, D]   w1_ref: [D, H]   b1_ref: [1, H]
    # w2_ref: [1, H]    b2_ref: [1, 1] (SMEM scalar)   o_ref: [TB, 1]
    x = x_ref[...]

    # First linear (MXU, f32 accumulate) + bias + ReLU (VPU).
    h = jnp.dot(
        x,
        w1_ref[...],
        precision=lax.Precision.HIGHEST,
        preferred_element_type=jnp.float32,
    )
    h = jnp.maximum(h + b1_ref[...], 0.0)

    # Second linear (H -> 1): VPU multiply with the w2 row + lane reduction.
    # keepdims=True keeps one scalar per sublane row -> [TB, 1]; no cross-lane
    # relayout / transpose, and the output store is directly the [B, 1] slab.
    logit = jnp.sum(h * w2_ref[...], axis=-1, keepdims=True) + b2_ref[0, 0]
    o_ref[...] = logit.astype(o_ref.dtype)


def _round_up(n, m):
    return -(-n // m) * m


def _pick_batch_tile(B, D, itemsize, *, target_tile_bytes=4 << 20,
                     max_tile_bytes=16 << 20):
    """Pick a batch tile so the x DMA is multi-MiB (amortizes per-grid-step
    overhead) while staying well inside v7x's 64 MiB VMEM, and so that large
    batches get an even number (>= 2) of grid steps for megacore sharding."""
    row_bytes = max(D * itemsize, 1)
    tb = max(target_tile_bytes // row_bytes, 8)
    tb = min(tb, max(max_tile_bytes // row_bytes, 8))
    tb = max((tb // 128) * 128, 8)
    if B <= tb:
        return B                          # single full-extent block, no padding
    nb = -(-B // tb)                      # number of blocks at the target tile
    if nb % 2:
        nb += 1                           # even block count -> both v7x TCs busy
    return _round_up(-(-B // nb), 8)


def clip_mlp_forward(x, w1, b1, w2, b2, *, block_b=None):
    """CLIP_MLP forward: relu(x @ w1 + b1) @ w2 + b2 -> [B, 1].

    x : [B, D]; w1 : [D, H]; b1 : [H] or [1, H]; w2 : [H, 1] or [H]; b2 : [1]/[1,1].
    """
    B, D = x.shape
    H = w1.shape[1]

    b1 = jnp.asarray(b1).reshape(1, H)
    w2_row = jnp.asarray(w2).reshape(1, H)              # layer 2 as a lane-wise row
    b2 = jnp.asarray(b2).reshape(1, 1).astype(jnp.float32)

    itemsize = jnp.dtype(x.dtype).itemsize
    if block_b is None:
        tb = _pick_batch_tile(B, D, itemsize)
    else:
        tb = min(int(block_b), B)
        if tb < B:
            tb = max((tb // 8) * 8, 8)                  # sublane-aligned tiles
    grid = (pl.cdiv(B, tb),)

    # VMEM budget: double-buffered x + output tiles plus the resident params.
    param_bytes = (w1.size * jnp.dtype(w1.dtype).itemsize
                   + b1.size * jnp.dtype(b1.dtype).itemsize
                   + w2_row.size * jnp.dtype(w2_row.dtype).itemsize)
    vmem_needed = 2 * (tb * D * itemsize + tb * itemsize + param_bytes) + (2 << 20)
    vmem_limit = int(min(max(vmem_needed, 32 << 20), 64 << 20))   # 64 MiB cap (v7x)

    cost = pl.CostEstimate(
        flops=2 * B * D * H + 3 * B * H,
        transcendentals=0,
        bytes_accessed=B * D * itemsize + param_bytes + B * itemsize,
    )

    return pl.pallas_call(
        clip_mlp_kernel,
        out_shape=jax.ShapeDtypeStruct((B, 1), x.dtype),
        grid_spec=pl.GridSpec(
            grid=grid,
            in_specs=[
                pl.BlockSpec((tb, D), lambda i: (i, 0)),            # x: tiled batch
                pl.BlockSpec((D, H), lambda i: (0, 0)),             # w1: VMEM-resident
                pl.BlockSpec((1, H), lambda i: (0, 0)),             # b1: VMEM-resident
                pl.BlockSpec((1, H), lambda i: (0, 0)),             # w2 row: VMEM-resident
                pl.BlockSpec(memory_space=pltpu.MemorySpace.SMEM),  # b2 scalar in SMEM
            ],
            out_specs=pl.BlockSpec((tb, 1), lambda i: (i, 0)),      # [TB, 1] logits
        ),
        compiler_params=pltpu.CompilerParams(
            dimension_semantics=("parallel",),   # independent batch tiles
            vmem_limit_bytes=vmem_limit,
        ),
        cost_estimate=cost,
    )(x, w1, b1, w2_row, b2)


def _reference(x, w1, b1, w2, b2):
    h = jnp.maximum(
        jnp.dot(x, w1, precision=lax.Precision.HIGHEST) + b1.reshape(1, -1), 0.0)
    return (jnp.dot(h, w2.reshape(-1, 1), precision=lax.Precision.HIGHEST)
            + b2.reshape(1, 1))


if __name__ == "__main__":
    # Small shapes consistent with the module: batch=8, input_dim=32, hidden=32.
    B, D, H = 8, 32, 32

    key = jax.random.PRNGKey(0)
    kx, kw1, kb1, kw2, kb2, kx2 = jax.random.split(key, 6)

    x = jax.random.normal(kx, (B, D), dtype=jnp.float32)

    # Deterministic synthetic params (shapes mirror nn.Linear(D,H) / nn.Linear(H,1)).
    bound1 = 1.0 / (D ** 0.5)
    w1 = jax.random.uniform(kw1, (D, H), minval=-bound1, maxval=bound1, dtype=jnp.float32)
    b1 = jax.random.uniform(kb1, (H,), minval=-bound1, maxval=bound1, dtype=jnp.float32)
    bound2 = 1.0 / (H ** 0.5)
    w2 = jax.random.uniform(kw2, (H, 1), minval=-bound2, maxval=bound2, dtype=jnp.float32)
    b2 = jax.random.uniform(kb2, (1,), minval=-bound2, maxval=bound2, dtype=jnp.float32)

    # Single full-extent block path.
    out = jax.block_until_ready(clip_mlp_forward(x, w1, b1, w2, b2))
    ref = _reference(x, w1, b1, w2, b2)
    assert out.shape == (B, 1)
    assert jnp.allclose(out, ref, atol=1e-5, rtol=1e-5), "mismatch (small batch)"

    # Multi-block path with a partial last block (no padding): grid = cdiv(300,128)=3.
    B2 = 300
    x2 = jax.random.normal(kx2, (B2, D), dtype=jnp.float32)
    out2 = jax.block_until_ready(clip_mlp_forward(x2, w1, b1, w2, b2, block_b=128))
    ref2 = _reference(x2, w1, b1, w2, b2)
    assert out2.shape == (B2, 1)
    assert jnp.allclose(out2, ref2, atol=1e-5, rtol=1e-5), "mismatch (tiled batch)"

    # Auto tile-size path (collapses to one full-extent block at this small B).
    out3 = jax.block_until_ready(clip_mlp_forward(x2, w1, b1, w2, b2))
    assert out3.shape == (B2, 1)
    assert jnp.allclose(out3, ref2, atol=1e-5, rtol=1e-5), "mismatch (auto tile)"

    print("KERNEL_OK")
</pallas_src>

<mosaic_0001>
module attributes {stable_mosaic.version = 11 : i64} {
  func.func @clip_mlp_kernel(%arg0: i32, %arg1: memref<8x32xf32, #tpu.memory_space<vmem>>, %arg2: memref<32x32xf32, #tpu.memory_space<vmem>>, %arg3: memref<1x32xf32, #tpu.memory_space<vmem>>, %arg4: memref<1x32xf32, #tpu.memory_space<vmem>>, %arg5: memref<1x1xf32, #tpu.memory_space<smem>>, %arg6: memref<8x1xf32, #tpu.memory_space<vmem>>) attributes {dimension_semantics = [#tpu.dimension_semantics<parallel>], iteration_bounds = array<i64: 1>, scalar_prefetch = 0 : i64, scratch_operands = 0 : i64, tpu.core_type = #tpu.core_type<tc>, window_params = [{transform_indices = @transform_0, window_bounds = array<i64: 8, 32>}, {pipeline_mode = #tpu.pipeline_mode<synchronous>, transform_indices = @transform_1, window_bounds = array<i64: 32, 32>}, {pipeline_mode = #tpu.pipeline_mode<synchronous>, transform_indices = @transform_2, window_bounds = array<i64: 1, 32>}, {pipeline_mode = #tpu.pipeline_mode<synchronous>, transform_indices = @transform_3, window_bounds = array<i64: 1, 32>}, {transform_indices = @transform_4, window_bounds = array<i64: 1, 1>}, {transform_indices = @transform_5, window_bounds = array<i64: 8, 1>}]} {
    %c0 = arith.constant 0 : index
    %c0_0 = arith.constant 0 : index
    %0 = vector.load %arg1[%c0, %c0_0] : memref<8x32xf32, #tpu.memory_space<vmem>>, vector<8x32xf32>
    %c0_1 = arith.constant 0 : index
    %c0_2 = arith.constant 0 : index
    %1 = vector.load %arg2[%c0_1, %c0_2] : memref<32x32xf32, #tpu.memory_space<vmem>>, vector<32x32xf32>
    %cst = arith.constant dense<0.000000e+00> : vector<8x32xf32>
    %2 = tpu.matmul %0, %1, %cst {dimension_numbers = #tpu.dot_dimension_numbers<[1], [0], [0], [1], [0, 0, 1, 1], [], []>, precision = #tpu.contract_precision<fp32>} : vector<8x32xf32>, vector<32x32xf32>, vector<8x32xf32> -> vector<8x32xf32>
    %c0_3 = arith.constant 0 : index
    %c0_4 = arith.constant 0 : index
    %3 = vector.load %arg3[%c0_3, %c0_4] : memref<1x32xf32, #tpu.memory_space<vmem>>, vector<1x32xf32>
    %4 = vector.broadcast %3 : vector<1x32xf32> to vector<8x32xf32>
    %5 = arith.addf %2, %4 : vector<8x32xf32>
    %cst_5 = arith.constant 0.000000e+00 : f32
    %6 = vector.broadcast %cst_5 : f32 to vector<8x32xf32>
    %7 = arith.maximumf %5, %6 : vector<8x32xf32>
    %c0_6 = arith.constant 0 : index
    %c0_7 = arith.constant 0 : index
    %8 = vector.load %arg4[%c0_6, %c0_7] : memref<1x32xf32, #tpu.memory_space<vmem>>, vector<1x32xf32>
    %9 = vector.broadcast %8 : vector<1x32xf32> to vector<8x32xf32>
    %10 = arith.mulf %7, %9 : vector<8x32xf32>
    %cst_8 = arith.constant dense<0.000000e+00> : vector<8xf32>
    %11 = vector.multi_reduction <add>, %10, %cst_8 [1] : vector<8x32xf32> to vector<8xf32>
    %12 = vector.shape_cast %11 : vector<8xf32> to vector<8x1xf32>
    %c0_9 = arith.constant 0 : index
    %c0_10 = arith.constant 0 : index
    %13 = memref.load %arg5[%c0_9, %c0_10] : memref<1x1xf32, #tpu.memory_space<smem>>
    %14 = vector.broadcast %13 : f32 to vector<8x1xf32>
    %15 = arith.addf %12, %14 : vector<8x1xf32>
    %c0_11 = arith.constant 0 : index
    %c0_12 = arith.constant 0 : index
    %16 = vector.load %arg6[%c0_11, %c0_12] : memref<8x1xf32, #tpu.memory_space<vmem>>, vector<8x1xf32>
    tpu.vector_store %arg6[%c0_11, %c0_12], %15 {strides = array<i32>} : memref<8x1xf32, #tpu.memory_space<vmem>>, vector<8x1xf32>,
    return
  }
  func.func @transform_0(%arg0: i32) -> (i32, i32) {
    %c0_i32 = arith.constant 0 : i32
    %c0_i32_0 = arith.constant 0 : i32
    return %arg0, %c0_i32 : i32, i32
  }
  func.func @transform_1(%arg0: i32) -> (i32, i32) {
    %c0_i32 = arith.constant 0 : i32
    %c0_i32_0 = arith.constant 0 : i32
    %c0_i32_1 = arith.constant 0 : i32
    return %c0_i32, %c0_i32_0 : i32, i32
  }
  func.func @transform_2(%arg0: i32) -> (i32, i32) {
    %c0_i32 = arith.constant 0 : i32
    %c0_i32_0 = arith.constant 0 : i32
    %c0_i32_1 = arith.constant 0 : i32
    return %c0_i32, %c0_i32_0 : i32, i32
  }
  func.func @transform_3(%arg0: i32) -> (i32, i32) {
    %c0_i32 = arith.constant 0 : i32
    %c0_i32_0 = arith.constant 0 : i32
    %c0_i32_1 = arith.constant 0 : i32
    return %c0_i32, %c0_i32_0 : i32, i32
  }
  func.func @transform_4(%arg0: i32) -> (i32, i32) {
    %c0_i32 = arith.constant 0 : i32
    %c0_i32_0 = arith.constant 0 : i32
    %c0_i32_1 = arith.constant 0 : i32
    return %c0_i32, %c0_i32_0 : i32, i32
  }
  func.func @transform_5(%arg0: i32) -> (i32, i32) {
    %c0_i32 = arith.constant 0 : i32
    %c0_i32_0 = arith.constant 0 : i32
    return %arg0, %c0_i32 : i32, i32
  }
}

</mosaic_0001>

<llo_original>
// kernel: tpu_custom_call.1
$region0: #{tpu_custom_call.1}
  #allocation0 [shape = 'u32[]', space=smem, size = 0x4, offset = 0x4, fixed_abs, tag = 'smem constant byte address 0x4 - core index']
  #allocation1 [shape = 'u32[144,128]{1,0:T(1,128)}', space=vmem, size = 0x12000, scoped, tag = 'internal scratch']
  #allocation2 [shape = 'f32[1,1]{1,0:T(1,128)S(6)}', space=smem, size = 0x200, scoped, tag = 'scoped memory for tpu_custom_call.1']
  %s0 = inlined_call_operand.hbm [shape: f32[8,32], index: 0, kind: input, shape index: {}]
  %s1 = inlined_call_operand.hbm [shape: f32[32,32], index: 1, kind: input, shape index: {}]
  %s2 = inlined_call_operand.vmem [shape: f32[1,32], index: 2, kind: input, shape index: {}]
  %s3 = inlined_call_operand.vmem [shape: f32[1,32], index: 3, kind: input, shape index: {}]
  %s4 = inlined_call_operand.<no memory space> [shape: f32[1,1], index: 4, kind: input, shape index: {}]
  %s5 = inlined_call_operand.vmem [shape: f32[8,1], index: 5, kind: output, shape index: {}]
  %s6 = sld [smem:[#allocation0]]
  $region38: #{tpu_custom_call.1} parent=0
    _
  %s8 = ssub.s32 1, %s6
  %s9 = scalar_select 0, %s8, %s6
  %10 = sst [smem:[#allocation2]] %s4
  $region1: #{tpu_custom_call.1} parent=0
    #allocation3 [shape = 'u8[4096]{0}', space=vmem, size = 0x1000, scoped, tag = 'input window, operand 0, single buffered']
    #allocation4 [shape = 's32[1]{0}', space=sflag, size = 0x4, scoped, tag = 'scoped memory for tpu_custom_call.1']
    #allocation5 [shape = 'u8[16384]{0}', space=vmem, size = 0x4000, scoped, tag = 'input window, operand 1, single buffered']
    #allocation6 [shape = 's32[1]{0}', space=sflag, size = 0x4, scoped, tag = 'scoped memory for tpu_custom_call.1']
    %11 = vsyncpa [#allocation4], 0
    %12 = vsyncpa [#allocation6], 0
    // Predicated region
    $region2: #{tpu_custom_call.1} parent=1 // pred_check
      _
    $region3: #{tpu_custom_call.1} parent=1 // pred_check_branch
      %14 = sbr.rel (0) target = $region5
    $region4: #{tpu_custom_call.1} parent=1 // pred_region
      %s16 = ssub.s32 128, 128
      %17 = vsyncadd [#allocation4], %s16
      %s19 = sshll.u32 [#allocation3], 4
      %s20 = int_to_ptr.vmem [resolvable:$true] %s19
      %22 = dma.hbm_to_vmem [thread:$0]  %s0, 128, %s20, [#allocation4]
    $region5: #{tpu_custom_call.1} parent=1 // pred_fallthru
      _
    // Predicated region
    $region6: #{tpu_custom_call.1} parent=1 // pred_check
      _
    $region7: #{tpu_custom_call.1} parent=1 // pred_check_branch
      %24 = sbr.rel (0) target = $region9
    $region8: #{tpu_custom_call.1} parent=1 // pred_region
      %s26 = ssub.s32 512, 512
      %27 = vsyncadd [#allocation6], %s26
      %s28 = sshll.u32 [#allocation5], 4
      %s29 = int_to_ptr.vmem [resolvable:$true] %s28
      %34 = dma.hbm_to_vmem [thread:$0]  %s1, 512, %s29, [#allocation6], 128, 128, 8
    $region9: #{tpu_custom_call.1} parent=1 // pred_fallthru
      _
    // Predicated region
    $region10: #{tpu_custom_call.1} parent=1 // pred_check
      _
    $region11: #{tpu_custom_call.1} parent=1 // pred_check_branch
      %36 = sbr.rel (0) target = $region13
    $region12: #{tpu_custom_call.1} parent=1 // pred_region
      _
    $region13: #{tpu_custom_call.1} parent=1 // pred_fallthru
      _
    // Predicated region
    $region14: #{tpu_custom_call.1} parent=1 // pred_check
      _
    $region15: #{tpu_custom_call.1} parent=1 // pred_check_branch
      %38 = sbr.rel (0) target = $region17
    $region16: #{tpu_custom_call.1} parent=1 // pred_region
      _
    $region17: #{tpu_custom_call.1} parent=1 // pred_fallthru
      _
    // Predicated region
    $region18: #{tpu_custom_call.1} parent=1 // pred_check
      _
    $region19: #{tpu_custom_call.1} parent=1 // pred_check_branch
      %40 = sbr.rel (0) target = $region21
    $region20: #{tpu_custom_call.1} parent=1 // pred_region
      _
    $region21: #{tpu_custom_call.1} parent=1 // pred_fallthru
      _
    // Predicated region
    $region22: #{tpu_custom_call.1} parent=1 // pred_check
      _
    $region23: #{tpu_custom_call.1} parent=1 // pred_check_branch
      %42 = sbr.rel (0) target = $region25
    $region24: #{tpu_custom_call.1} parent=1 // pred_region
      %43 = dma.done [#allocation4], 128
    $region25: #{tpu_custom_call.1} parent=1 // pred_fallthru
      _
    // Predicated region
    $region26: #{tpu_custom_call.1} parent=1 // pred_check
      _
    $region27: #{tpu_custom_call.1} parent=1 // pred_check_branch
      %45 = sbr.rel (0) target = $region29
    $region28: #{tpu_custom_call.1} parent=1 // pred_region
      %46 = dma.done [#allocation6], 512
    $region29: #{tpu_custom_call.1} parent=1 // pred_fallthru
      _
    %v47 = vld [vmem:[#allocation3] sm:$0xff]
    %v48 = vld [vmem:[#allocation5] sm:$0xff]
    %v49 = vld [vmem:[#allocation5 + $0x8] sm:$0xff]
    %v50 = vld [vmem:[#allocation5 + $0x10] sm:$0xff]
    %v51 = vld [vmem:[#allocation5 + $0x18] sm:$0xff]
    %v52 = vld [vmem:[%s2] sm:$0x1]
    %v54 = vlaneseq
    %v55 = vshrl.u32 %v54, 7
    %v56 = vsub.s32 0, %v55
    %v57 = vrot.slane %v52, %v56
    %vm59 = vcmask 261120
    %v61 = vsel %vm59, %v47, 0
    %63 = vmatprep.subr.mxu0 0.0
    %v64 = vand.u32 %v48, 4294901760
    %65 = vmatpush1.msra.mxu0 %v64
    %66 = vmatprep.subr.mxu0 0.0
    %v67 = vand.u32 %v49, 4294901760
    %68 = vmatpush1.msra.mxu0 %v67
    %69 = vmatprep.subr.mxu0 0.0
    %v70 = vand.u32 %v50, 4294901760
    %71 = vmatpush1.msra.mxu0 %v70
    %72 = vmatprep.subr.mxu0 0.0
    %v73 = vand.u32 %v51, 4294901760
    %74 = vmatpush1.msra.mxu0 %v73
    %75 = vmatprep.subr.mxu0 0.0
    %76 = vmatpush1.msra.mxu0 0.0
    %77 = vmatprep.subr.mxu0 0.0
    %78 = vmatpush1.msra.mxu0 0.0
    %79 = vmatprep.subr.mxu0 0.0
    %80 = vmatpush1.msra.mxu0 0.0
    %81 = vmatprep.subr.mxu0 0.0
    %82 = vmatpush1.msra.mxu0 0.0
    %83 = vmatprep.subr.mxu0 0.0
    %84 = vmatpush1.msra.mxu0 0.0
    %85 = vmatprep.subr.mxu0 0.0
    %86 = vmatpush1.msra.mxu0 0.0
    %87 = vmatprep.subr.mxu0 0.0
    %88 = vmatpush1.msra.mxu0 0.0
    %89 = vmatprep.subr.mxu0 0.0
    %90 = vmatpush1.msra.mxu0 0.0
    %91 = vmatprep.subr.mxu0 0.0
    %92 = vmatpush1.msra.mxu0 0.0
    %93 = vmatprep.subr.mxu0 0.0
    %94 = vmatpush1.msra.mxu0 0.0
    %95 = vmatprep.subr.mxu0 0.0
    %96 = vmatpush1.msra.mxu0 0.0
    %97 = vmatprep.subr.mxu0 0.0
    %98 = vmatpush1.msra.mxu0 0.0
    %99 = vmatprep.subr.mxu0 0.0
    %100 = vmatpush1.msra.mxu0 0.0
    %101 = vmatprep.subr.mxu0 0.0
    %102 = vmatpush1.msra.mxu0 0.0
    %103 = vmatprep.subr.mxu0 0.0
    %104 = vmatpush1.msra.mxu0 0.0
    %105 = vmatprep.subr.mxu0 0.0
    %106 = vmatpush1.msra.mxu0 0.0
    %107 = vmatprep.subr.mxu0 0.0
    %108 = vmatpush1.msra.mxu0 0.0
    %109 = vmatprep.subr.mxu0 0.0
    %110 = vmatpush1.msra.mxu0 0.0
    %111 = vmatprep.subr.mxu0 0.0
    %112 = vmatpush1.msra.mxu0 0.0
    %113 = vmatprep.subr.mxu0 0.0
    %114 = vmatpush1.msra.mxu0 0.0
    %115 = vmatprep.subr.mxu0 0.0
    %116 = vmatpush1.msra.mxu0 0.0
    %117 = vmatprep.subr.mxu0 0.0
    %118 = vmatpush1.msra.mxu0 0.0
    %119 = vmatprep.subr.mxu0 0.0
    %120 = vmatpush1.msra.mxu0 0.0
    %121 = vmatprep.subr.mxu0 0.0
    %122 = vmatpush1.msra.mxu0 0.0
    %123 = vmatprep.subr.mxu0 0.0
    %124 = vmatpush1.msra.mxu0 0.0
    %125 = vmatprep.subr.mxu0 0.0
    %126 = vmatpush1.msra.mxu0 0.0
    %127 = vmatprep.subr.mxu0 0.0
    %128 = vmatpush1.msra.mxu0 0.0
    %129 = vmatprep.subr.mxu0 0.0
    %130 = vmatpush1.msra.mxu0 0.0
    %131 = vmatprep.mubr.f32.mxu0 0.0
    %v132 = vand.u32 %v61, 4294901760
    %v133 = vsub.f32 %v61, %v132
    %v134 = vand.u32 %v133, 4294901760
    %v135 = vsub.f32 %v133, %v134
    %v136 = vand.u32 %v135, 4294901760
    %137 = vmatmul.mubr.f32.gmra.mrb[0].mxu0 %v136
    %v138 = vpop.f32.mrb[0].mxu0
    %v139 = vadd.f32 %v57, %v138
    %v140 = vpop.f32.mrb[0].mxu0
    %141 = vdwg.mxu0
    %142 = vmatprep.subr.mxu0 0.0
    %v143 = vand.u32 %v48, 4294901760
    %v144 = vsub.f32 %v48, %v143
    %v145 = vand.u32 %v144, 4294901760
    %v146 = vsub.f32 %v144, %v145
    %v147 = vand.u32 %v146, 4294901760
    %148 = vmatpush1.msra.mxu0 %v147
    %149 = vmatprep.subr.mxu0 0.0
    %v150 = vand.u32 %v49, 4294901760
    %v151 = vsub.f32 %v49, %v150
    %v152 = vand.u32 %v151, 4294901760
    %v153 = vsub.f32 %v151, %v152
    %v154 = vand.u32 %v153, 4294901760
    %155 = vmatpush1.msra.mxu0 %v154
    %156 = vmatprep.subr.mxu0 0.0
    %v157 = vand.u32 %v50, 4294901760
    %v158 = vsub.f32 %v50, %v157
    %v159 = vand.u32 %v158, 4294901760
    %v160 = vsub.f32 %v158, %v159
    %v161 = vand.u32 %v160, 4294901760
    %162 = vmatpush1.msra.mxu0 %v161
    %163 = vmatprep.subr.mxu0 0.0
    %v164 = vand.u32 %v51, 4294901760
    %v165 = vsub.f32 %v51, %v164
    %v166 = vand.u32 %v165, 4294901760
    %v167 = vsub.f32 %v165, %v166
    %v168 = vand.u32 %v167, 4294901760
    %169 = vmatpush1.msra.mxu0 %v168
    %170 = vmatprep.subr.mxu0 0.0
    %171 = vmatpush1.msra.mxu0 0.0
    %172 = vmatprep.subr.mxu0 0.0
    %173 = vmatpush1.msra.mxu0 0.0
    %174 = vmatprep.subr.mxu0 0.0
    %175 = vmatpush1.msra.mxu0 0.0
    %176 = vmatprep.subr.mxu0 0.0
    %177 = vmatpush1.msra.mxu0 0.0
    %178 = vmatprep.subr.mxu0 0.0
    %179 = vmatpush1.msra.mxu0 0.0
    %180 = vmatprep.subr.mxu0 0.0
    %181 = vmatpush1.msra.mxu0 0.0
    %182 = vmatprep.subr.mxu0 0.0
    %183 = vmatpush1.msra.mxu0 0.0
    %184 = vmatprep.subr.mxu0 0.0
    %185 = vmatpush1.msra.mxu0 0.0
    %186 = vmatprep.subr.mxu0 0.0
    %187 = vmatpush1.msra.mxu0 0.0
    %188 = vmatprep.subr.mxu0 0.0
    %189 = vmatpush1.msra.mxu0 0.0
    %190 = vmatprep.subr.mxu0 0.0
    %191 = vmatpush1.msra.mxu0 0.0
    %192 = vmatprep.subr.mxu0 0.0
    %193 = vmatpush1.msra.mxu0 0.0
    %194 = vmatprep.subr.mxu0 0.0
    %195 = vmatpush1.msra.mxu0 0.0
    %196 = vmatprep.subr.mxu0 0.0
    %197 = vmatpush1.msra.mxu0 0.0
    %198 = vmatprep.subr.mxu0 0.0
    %199 = vmatpush1.msra.mxu0 0.0
    %200 = vmatprep.subr.mxu0 0.0
    %201 = vmatpush1.msra.mxu0 0.0
    %202 = vmatprep.subr.mxu0 0.0
    %203 = vmatpush1.msra.mxu0 0.0
    %204 = vmatprep.subr.mxu0 0.0
    %205 = vmatpush1.msra.mxu0 0.0
    %206 = vmatprep.subr.mxu0 0.0
    %207 = vmatpush1.msra.mxu0 0.0
    %208 = vmatprep.subr.mxu0 0.0
    %209 = vmatpush1.msra.mxu0 0.0
    %210 = vmatprep.subr.mxu0 0.0
    %211 = vmatpush1.msra.mxu0 0.0
    %212 = vmatprep.subr.mxu0 0.0
    %213 = vmatpush1.msra.mxu0 0.0
    %214 = vmatprep.subr.mxu0 0.0
    %215 = vmatpush1.msra.mxu0 0.0
    %216 = vmatprep.subr.mxu0 0.0
    %217 = vmatpush1.msra.mxu0 0.0
    %218 = vmatprep.subr.mxu0 0.0
    %219 = vmatpush1.msra.mxu0 0.0
    %220 = vmatprep.subr.mxu0 0.0
    %221 = vmatpush1.msra.mxu0 0.0
    %222 = vmatprep.subr.mxu0 0.0
    %223 = vmatpush1.msra.mxu0 0.0
    %224 = vmatprep.subr.mxu0 0.0
    %225 = vmatpush1.msra.mxu0 0.0
    %226 = vmatprep.mubr.f32.mxu0 0.0
    %v227 = vand.u32 %v61, 4294901760
    %228 = vmatmul.mubr.f32.gmra.mrb[0].mxu0 %v227
    %v229 = vpop.f32.mrb[0].mxu0
    %v230 = vadd.f32 %v139, %v229
    %v231 = vpop.f32.mrb[0].mxu0
    %232 = vdwg.mxu0
    %233 = vmatprep.subr.mxu0 0.0
    %v234 = vand.u32 %v48, 4294901760
    %v235 = vsub.f32 %v48, %v234
    %236 = vmatpush1.msra.mxu0 %v235
    %237 = vmatprep.subr.mxu0 0.0
    %v238 = vand.u32 %v49, 4294901760
    %v239 = vsub.f32 %v49, %v238
    %240 = vmatpush1.msra.mxu0 %v239
    %241 = vmatprep.subr.mxu0 0.0
    %v242 = vand.u32 %v50, 4294901760
    %v243 = vsub.f32 %v50, %v242
    %244 = vmatpush1.msra.mxu0 %v243
    %245 = vmatprep.subr.mxu0 0.0
    %v246 = vand.u32 %v51, 4294901760
    %v247 = vsub.f32 %v51, %v246
    %248 = vmatpush1.msra.mxu0 %v247
    %249 = vmatprep.subr.mxu0 0.0
    %250 = vmatpush1.msra.mxu0 0.0
    %251 = vmatprep.subr.mxu0 0.0
    %252 = vmatpush1.msra.mxu0 0.0
    %253 = vmatprep.subr.mxu0 0.0
    %254 = vmatpush1.msra.mxu0 0.0
    %255 = vmatprep.subr.mxu0 0.0
    %256 = vmatpush1.msra.mxu0 0.0
    %257 = vmatprep.subr.mxu0 0.0
    %258 = vmatpush1.msra.mxu0 0.0
    %259 = vmatprep.subr.mxu0 0.0
    %260 = vmatpush1.msra.mxu0 0.0
    %261 = vmatprep.subr.mxu0 0.0
    %262 = vmatpush1.msra.mxu0 0.0
    %263 = vmatprep.subr.mxu0 0.0
    %264 = vmatpush1.msra.mxu0 0.0
    %265 = vmatprep.subr.mxu0 0.0
    %266 = vmatpush1.msra.mxu0 0.0
    %267 = vmatprep.subr.mxu0 0.0
    %268 = vmatpush1.msra.mxu0 0.0
    %269 = vmatprep.subr.mxu0 0.0
    %270 = vmatpush1.msra.mxu0 0.0
    %271 = vmatprep.subr.mxu0 0.0
    %272 = vmatpush1.msra.mxu0 0.0
    %273 = vmatprep.subr.mxu0 0.0
    %274 = vmatpush1.msra.mxu0 0.0
    %275 = vmatprep.subr.mxu0 0.0
    %276 = vmatpush1.msra.mxu0 0.0
    %277 = vmatprep.subr.mxu0 0.0
    %278 = vmatpush1.msra.mxu0 0.0
    %279 = vmatprep.subr.mxu0 0.0
    %280 = vmatpush1.msra.mxu0 0.0
    %281 = vmatprep.subr.mxu0 0.0
    %282 = vmatpush1.msra.mxu0 0.0
    %283 = vmatprep.subr.mxu0 0.0
    %284 = vmatpush1.msra.mxu0 0.0
    %285 = vmatprep.subr.mxu0 0.0
    %286 = vmatpush1.msra.mxu0 0.0
    %287 = vmatprep.subr.mxu0 0.0
    %288 = vmatpush1.msra.mxu0 0.0
    %289 = vmatprep.subr.mxu0 0.0
    %290 = vmatpush1.msra.mxu0 0.0
    %291 = vmatprep.subr.mxu0 0.0
    %292 = vmatpush1.msra.mxu0 0.0
    %293 = vmatprep.subr.mxu0 0.0
    %294 = vmatpush1.msra.mxu0 0.0
    %295 = vmatprep.subr.mxu0 0.0
    %296 = vmatpush1.msra.mxu0 0.0
    %297 = vmatprep.subr.mxu0 0.0
    %298 = vmatpush1.msra.mxu0 0.0
    %299 = vmatprep.subr.mxu0 0.0
    %300 = vmatpush1.msra.mxu0 0.0
    %301 = vmatprep.subr.mxu0 0.0
    %302 = vmatpush1.msra.mxu0 0.0
    %303 = vmatprep.subr.mxu0 0.0
    %304 = vmatpush1.msra.mxu0 0.0
    %305 = vmatprep.mubr.f32.mxu0 0.0
    %v306 = vand.u32 %v61, 4294901760
    %v307 = vsub.f32 %v61, %v306
    %308 = vmatmul.mubr.f32.gmra.mrb[0].mxu0 %v307
    %v309 = vpop.f32.mrb[0].mxu0
    %v310 = vadd.f32 %v230, %v309
    %v311 = vpop.f32.mrb[0].mxu0
    %312 = vdwg.mxu0
    %313 = vmatprep.subr.mxu0 0.0
    %v314 = vand.u32 %v48, 4294901760
    %315 = vmatpush1.msra.mxu0 %v314
    %316 = vmatprep.subr.mxu0 0.0
    %v317 = vand.u32 %v49, 4294901760
    %318 = vmatpush1.msra.mxu0 %v317
    %319 = vmatprep.subr.mxu0 0.0
    %v320 = vand.u32 %v50, 4294901760
    %321 = vmatpush1.msra.mxu0 %v320
    %322 = vmatprep.subr.mxu0 0.0
    %v323 = vand.u32 %v51, 4294901760
    %324 = vmatpush1.msra.mxu0 %v323
    %325 = vmatprep.subr.mxu0 0.0
    %326 = vmatpush1.msra.mxu0 0.0
    %327 = vmatprep.subr.mxu0 0.0
    %328 = vmatpush1.msra.mxu0 0.0
    %329 = vmatprep.subr.mxu0 0.0
    %330 = vmatpush1.msra.mxu0 0.0
    %331 = vmatprep.subr.mxu0 0.0
    %332 = vmatpush1.msra.mxu0 0.0
    %333 = vmatprep.subr.mxu0 0.0
    %334 = vmatpush1.msra.mxu0 0.0
    %335 = vmatprep.subr.mxu0 0.0
    %336 = vmatpush1.msra.mxu0 0.0
    %337 = vmatprep.subr.mxu0 0.0
    %338 = vmatpush1.msra.mxu0 0.0
    %339 = vmatprep.subr.mxu0 0.0
    %340 = vmatpush1.msra.mxu0 0.0
    %341 = vmatprep.subr.mxu0 0.0
    %342 = vmatpush1.msra.mxu0 0.0
    %343 = vmatprep.subr.mxu0 0.0
    %344 = vmatpush1.msra.mxu0 0.0
    %345 = vmatprep.subr.mxu0 0.0
    %346 = vmatpush1.msra.mxu0 0.0
    %347 = vmatprep.subr.mxu0 0.0
    %348 = vmatpush1.msra.mxu0 0.0
    %349 = vmatprep.subr.mxu0 0.0
    %350 = vmatpush1.msra.mxu0 0.0
    %351 = vmatprep.subr.mxu0 0.0
    %352 = vmatpush1.msra.mxu0 0.0
    %353 = vmatprep.subr.mxu0 0.0
    %354 = vmatpush1.msra.mxu0 0.0
    %355 = vmatprep.subr.mxu0 0.0
    %356 = vmatpush1.msra.mxu0 0.0
    %357 = vmatprep.subr.mxu0 0.0
    %358 = vmatpush1.msra.mxu0 0.0
    %359 = vmatprep.subr.mxu0 0.0
    %360 = vmatpush1.msra.mxu0 0.0
    %361 = vmatprep.subr.mxu0 0.0
    %362 = vmatpush1.msra.mxu0 0.0
    %363 = vmatprep.subr.mxu0 0.0
    %364 = vmatpush1.msra.mxu0 0.0
    %365 = vmatprep.subr.mxu0 0.0
    %366 = vmatpush1.msra.mxu0 0.0
    %367 = vmatprep.subr.mxu0 0.0
    %368 = vmatpush1.msra.mxu0 0.0
    %369 = vmatprep.subr.mxu0 0.0
    %370 = vmatpush1.msra.mxu0 0.0
    %371 = vmatprep.subr.mxu0 0.0
    %372 = vmatpush1.msra.mxu0 0.0
    %373 = vmatprep.subr.mxu0 0.0
    %374 = vmatpush1.msra.mxu0 0.0
    %375 = vmatprep.subr.mxu0 0.0
    %376 = vmatpush1.msra.mxu0 0.0
    %377 = vmatprep.subr.mxu0 0.0
    %378 = vmatpush1.msra.mxu0 0.0
    %379 = vmatprep.subr.mxu0 0.0
    %380 = vmatpush1.msra.mxu0 0.0
    %381 = vmatprep.mubr.f32.mxu0 0.0
    %v382 = vand.u32 %v61, 4294901760
    %v383 = vsub.f32 %v61, %v382
    %v384 = vand.u32 %v383, 4294901760
    %385 = vmatmul.mubr.f32.gmra.mrb[0].mxu0 %v384
    %v386 = vpop.f32.mrb[0].mxu0
    %v387 = vadd.f32 %v310, %v386
    %v388 = vpop.f32.mrb[0].mxu0
    %389 = vdwg.mxu0
    %390 = vmatprep.subr.mxu0 0.0
    %v391 = vand.u32 %v48, 4294901760
    %v392 = vsub.f32 %v48, %v391
    %v393 = vand.u32 %v392, 4294901760
    %394 = vmatpush1.msra.mxu0 %v393
    %395 = vmatprep.subr.mxu0 0.0
    %v396 = vand.u32 %v49, 4294901760
    %v397 = vsub.f32 %v49, %v396
    %v398 = vand.u32 %v397, 4294901760
    %399 = vmatpush1.msra.mxu0 %v398
    %400 = vmatprep.subr.mxu0 0.0
    %v401 = vand.u32 %v50, 4294901760
    %v402 = vsub.f32 %v50, %v401
    %v403 = vand.u32 %v402, 4294901760
    %404 = vmatpush1.msra.mxu0 %v403
    %405 = vmatprep.subr.mxu0 0.0
    %v406 = vand.u32 %v51, 4294901760
    %v407 = vsub.f32 %v51, %v406
    %v408 = vand.u32 %v407, 4294901760
    %409 = vmatpush1.msra.mxu0 %v408
    %410 = vmatprep.subr.mxu0 0.0
    %411 = vmatpush1.msra.mxu0 0.0
    %412 = vmatprep.subr.mxu0 0.0
    %413 = vmatpush1.msra.mxu0 0.0
    %414 = vmatprep.subr.mxu0 0.0
    %415 = vmatpush1.msra.mxu0 0.0
    %416 = vmatprep.subr.mxu0 0.0
    %417 = vmatpush1.msra.mxu0 0.0
    %418 = vmatprep.subr.mxu0 0.0
    %419 = vmatpush1.msra.mxu0 0.0
    %420 = vmatprep.subr.mxu0 0.0
    %421 = vmatpush1.msra.mxu0 0.0
    %422 = vmatprep.subr.mxu0 0.0
    %423 = vmatpush1.msra.mxu0 0.0
    %424 = vmatprep.subr.mxu0 0.0
    %425 = vmatpush1.msra.mxu0 0.0
    %426 = vmatprep.subr.mxu0 0.0
    %427 = vmatpush1.msra.mxu0 0.0
    %428 = vmatprep.subr.mxu0 0.0
    %429 = vmatpush1.msra.mxu0 0.0
    %430 = vmatprep.subr.mxu0 0.0
    %431 = vmatpush1.msra.mxu0 0.0
    %432 = vmatprep.subr.mxu0 0.0
    %433 = vmatpush1.msra.mxu0 0.0
    %434 = vmatprep.subr.mxu0 0.0
    %435 = vmatpush1.msra.mxu0 0.0
    %436 = vmatprep.subr.mxu0 0.0
    %437 = vmatpush1.msra.mxu0 0.0
    %438 = vmatprep.subr.mxu0 0.0
    %439 = vmatpush1.msra.mxu0 0.0
    %440 = vmatprep.subr.mxu0 0.0
    %441 = vmatpush1.msra.mxu0 0.0
    %442 = vmatprep.subr.mxu0 0.0
    %443 = vmatpush1.msra.mxu0 0.0
    %444 = vmatprep.subr.mxu0 0.0
    %445 = vmatpush1.msra.mxu0 0.0
    %446 = vmatprep.subr.mxu0 0.0
    %447 = vmatpush1.msra.mxu0 0.0
    %448 = vmatprep.subr.mxu0 0.0
    %449 = vmatpush1.msra.mxu0 0.0
    %450 = vmatprep.subr.mxu0 0.0
    %451 = vmatpush1.msra.mxu0 0.0
    %452 = vmatprep.subr.mxu0 0.0
    %453 = vmatpush1.msra.mxu0 0.0
    %454 = vmatprep.subr.mxu0 0.0
    %455 = vmatpush1.msra.mxu0 0.0
    %456 = vmatprep.subr.mxu0 0.0
    %457 = vmatpush1.msra.mxu0 0.0
    %458 = vmatprep.subr.mxu0 0.0
    %459 = vmatpush1.msra.mxu0 0.0
    %460 = vmatprep.subr.mxu0 0.0
    %461 = vmatpush1.msra.mxu0 0.0
    %462 = vmatprep.subr.mxu0 0.0
    %463 = vmatpush1.msra.mxu0 0.0
    %464 = vmatprep.subr.mxu0 0.0
    %465 = vmatpush1.msra.mxu0 0.0
    %466 = vmatprep.mubr.f32.mxu0 0.0
    %v467 = vand.u32 %v61, 4294901760
    %468 = vmatmul.mubr.f32.gmra.mrb[0].mxu0 %v467
    %v469 = vpop.f32.mrb[0].mxu0
    %v470 = vadd.f32 %v387, %v469
    %v471 = vpop.f32.mrb[0].mxu0
    %472 = vdwg.mxu0
    %473 = vmatprep.subr.mxu0 0.0
    %v474 = vand.u32 %v48, 4294901760
    %475 = vmatpush1.msra.mxu0 %v474
    %476 = vmatprep.subr.mxu0 0.0
    %v477 = vand.u32 %v49, 4294901760
    %478 = vmatpush1.msra.mxu0 %v477
    %479 = vmatprep.subr.mxu0 0.0
    %v480 = vand.u32 %v50, 4294901760
    %481 = vmatpush1.msra.mxu0 %v480
    %482 = vmatprep.subr.mxu0 0.0
    %v483 = vand.u32 %v51, 4294901760
    %484 = vmatpush1.msra.mxu0 %v483
    %485 = vmatprep.subr.mxu0 0.0
    %486 = vmatpush1.msra.mxu0 0.0
    %487 = vmatprep.subr.mxu0 0.0
    %488 = vmatpush1.msra.mxu0 0.0
    %489 = vmatprep.subr.mxu0 0.0
    %490 = vmatpush1.msra.mxu0 0.0
    %491 = vmatprep.subr.mxu0 0.0
    %492 = vmatpush1.msra.mxu0 0.0
    %493 = vmatprep.subr.mxu0 0.0
    %494 = vmatpush1.msra.mxu0 0.0
    %495 = vmatprep.subr.mxu0 0.0
    %496 = vmatpush1.msra.mxu0 0.0
    %497 = vmatprep.subr.mxu0 0.0
    %498 = vmatpush1.msra.mxu0 0.0
    %499 = vmatprep.subr.mxu0 0.0
    %500 = vmatpush1.msra.mxu0 0.0
    %501 = vmatprep.subr.mxu0 0.0
    %502 = vmatpush1.msra.mxu0 0.0
    %503 = vmatprep.subr.mxu0 0.0
    %504 = vmatpush1.msra.mxu0 0.0
    %505 = vmatprep.subr.mxu0 0.0
    %506 = vmatpush1.msra.mxu0 0.0
    %507 = vmatprep.subr.mxu0 0.0
    %508 = vmatpush1.msra.mxu0 0.0
    %509 = vmatprep.subr.mxu0 0.0
    %510 = vmatpush1.msra.mxu0 0.0
    %511 = vmatprep.subr.mxu0 0.0
    %512 = vmatpush1.msra.mxu0 0.0
    %513 = vmatprep.subr.mxu0 0.0
    %514 = vmatpush1.msra.mxu0 0.0
    %515 = vmatprep.subr.mxu0 0.0
    %516 = vmatpush1.msra.mxu0 0.0
    %517 = vmatprep.subr.mxu0 0.0
    %518 = vmatpush1.msra.mxu0 0.0
    %519 = vmatprep.subr.mxu0 0.0
    %520 = vmatpush1.msra.mxu0 0.0
    %521 = vmatprep.subr.mxu0 0.0
    %522 = vmatpush1.msra.mxu0 0.0
    %523 = vmatprep.subr.mxu0 0.0
    %524 = vmatpush1.msra.mxu0 0.0
    %525 = vmatprep.subr.mxu0 0.0
    %526 = vmatpush1.msra.mxu0 0.0
    %527 = vmatprep.subr.mxu0 0.0
    %528 = vmatpush1.msra.mxu0 0.0
    %529 = vmatprep.subr.mxu0 0.0
    %530 = vmatpush1.msra.mxu0 0.0
    %531 = vmatprep.subr.mxu0 0.0
    %532 = vmatpush1.msra.mxu0 0.0
    %533 = vmatprep.subr.mxu0 0.0
    %534 = vmatpush1.msra.mxu0 0.0
    %535 = vmatprep.subr.mxu0 0.0
    %536 = vmatpush1.msra.mxu0 0.0
    %537 = vmatprep.subr.mxu0 0.0
    %538 = vmatpush1.msra.mxu0 0.0
    %539 = vmatprep.subr.mxu0 0.0
    %540 = vmatpush1.msra.mxu0 0.0
    %541 = vmatprep.mubr.f32.mxu0 0.0
    %v542 = vand.u32 %v61, 4294901760
    %543 = vmatmul.mubr.f32.gmra.mrb[0].mxu0 %v542
    %v544 = vpop.f32.mrb[0].mxu0
    %v545 = vadd.f32 %v470, %v544
    %v546 = vpop.f32.mrb[0].mxu0
    %547 = vdwg.mxu0
    %v548 = vmax.f32 %v545, 0.0
    %v549 = vld [vmem:[%s3] sm:$0x1]
    %v551 = vlaneseq
    %v552 = vshrl.u32 %v551, 7
    %v553 = vsub.s32 0, %v552
    %v554 = vrot.slane %v549, %v553
    %v556 = vmul.f32 %v548, %v554
    %v557 = vsel %vm59, %v556, 0.0
    %558 = vadd.xlane.f32.xlu0 %v557
    %v559 = vpop.xlane.xlu0 %558
    %s560 = sld [smem:[#allocation2]]
    %v561 = vstv %s560
    %v562 = vadd.f32 %v559, %v561
    %vm563 = vcmask 7168
    %564 = vst.msk [vmem:[%s5] sm:$0xff] %vm563, %v562
    // Predicated region
    $region30: #{tpu_custom_call.1} parent=1 // pred_check
      _
    $region31: #{tpu_custom_call.1} parent=1 // pred_check_branch
      %566 = sbr.rel (0) target = $region33
    $region32: #{tpu_custom_call.1} parent=1 // pred_region
      _
    $region33: #{tpu_custom_call.1} parent=1 // pred_fallthru
      _
    // Predicated region
    $region34: #{tpu_custom_call.1} parent=1 // pred_check
      _
    $region35: #{tpu_custom_call.1} parent=1 // pred_check_branch
      %568 = sbr.rel (0) target = $region37
    $region36: #{tpu_custom_call.1} parent=1 // pred_region
      _
    $region37: #{tpu_custom_call.1} parent=1 // pred_fallthru
      _
    %569 = vsyncpa [#allocation4], 1
    %570 = vsyncpa [#allocation6], 1

</llo_original>
